<compile_context>
chip_gen: v7x
topology: tpu7x:2x2x1
jax: 0.10.0
libtpu: 0.0.40
codegen_flags: <defaults>
</compile_context>

<pallas_src>
import functools

import jax
import jax.numpy as jnp
from jax.experimental import pallas as pl
from jax.experimental.pallas import tpu as pltpu

_LANE = 128  # feature axes (in_features / hidden / n_classes) padded to this


def _round_up(n, m):
    return ((n + m - 1) // m) * m


# ------------------------------ Pallas kernel -------------------------------

def fused_cnn_kernel(x_ref, wc_ref, w_ref, b_ref, o_ref):
    """Backbone stand-in + classifier head, whole batch, single invocation.

    x_ref : (B*HW, C) f32  NHWC-flattened input rows.
    wc_ref: (C, P)    f32  1x1 pointwise-conv weight (feature axis padded).
    w_ref : (3, P, P) f32  stacked [w1, w2, w3] classifier weights.
    b_ref : (4, P)    f32  stacked [b_conv, b1, b2, b3]; b3's padded class
                           lanes carry -1e30 so softmax ignores them.
    o_ref : (B, P)    f32  softmax probabilities (lanes >= n_classes are 0).
    """
    batch = o_ref.shape[0]
    hw = x_ref.shape[0] // batch
    p = wc_ref.shape[1]

    # ---- stand-in MobileNet features: 1x1 conv + ReLU6 + global avg pool ----
    y = jnp.dot(x_ref[...], wc_ref[...], preferred_element_type=jnp.float32)
    y = jnp.clip(y + b_ref[0:1, :], 0.0, 6.0)                  # bias + ReLU6
    feats = jnp.mean(y.reshape(batch, hw, p), axis=1)          # (B, P) sublane pool

    # ---- classifier: fc1 -> ReLU -> fc2 -> ReLU -> fc_final -> Softmax ------
    h = jnp.dot(feats, w_ref[0], preferred_element_type=jnp.float32) + b_ref[1:2, :]
    h = jnp.maximum(h, 0.0)
    h = jnp.dot(h, w_ref[1], preferred_element_type=jnp.float32) + b_ref[2:3, :]
    h = jnp.maximum(h, 0.0)
    logits = jnp.dot(h, w_ref[2], preferred_element_type=jnp.float32) + b_ref[3:4, :]

    # Padded class lanes carry a -1e30 bias -> exp underflows to exactly 0, so
    # the softmax normalizes over the real n_classes only (PyTorch dim=1).
    m = jnp.max(logits, axis=-1, keepdims=True)
    e = jnp.exp(logits - m)
    denom = jnp.sum(e, axis=-1, keepdims=True)
    o_ref[...] = e * pl.reciprocal(denom, approx=True)


# --------------------------- one-time parameter prep -------------------------

def prepare_params(params):
    """Pad feature axes to the lane width and pack operands.

    Runs ONCE, outside the jitted per-step forward, so the padded / stacked
    weights are cached and the forward issues no per-call weight-prep HLOs.
    """
    w_conv = jnp.asarray(params["w_conv"], jnp.float32)   # (C, F)
    w1 = jnp.asarray(params["w1"], jnp.float32)           # (F, H1)
    w2 = jnp.asarray(params["w2"], jnp.float32)           # (H1, H2)
    w3 = jnp.asarray(params["w3"], jnp.float32)           # (H2, N)
    c = w_conv.shape[0]
    n_classes = int(w3.shape[1])
    dims = (w_conv.shape[1], w1.shape[1], w2.shape[1], n_classes)
    p = max(_round_up(d, _LANE) for d in dims)

    def pad2(a, rows, cols, fill=0.0):
        return jnp.pad(a, ((0, rows - a.shape[0]), (0, cols - a.shape[1])),
                       constant_values=fill)

    w_conv_p = pad2(w_conv, c, p)                                          # (C, P)
    w_stack = jnp.stack([pad2(w1, p, p), pad2(w2, p, p), pad2(w3, p, p)])  # (3, P, P)
    b_stack = jnp.concatenate([
        pad2(jnp.asarray(params["b_conv"], jnp.float32), 1, p),
        pad2(jnp.asarray(params["b1"], jnp.float32), 1, p),
        pad2(jnp.asarray(params["b2"], jnp.float32), 1, p),
        pad2(jnp.asarray(params["b3"], jnp.float32), 1, p, fill=-1e30),
    ], axis=0)                                                             # (4, P)
    return w_conv_p, w_stack, b_stack, n_classes


# ------------------------------ jitted forward -------------------------------

@functools.partial(jax.jit, static_argnames=("n_classes",))
def simple_cnn_forward(x_nchw, w_conv_p, w_stack, b_stack, *, n_classes):
    """NCHW image batch -> (B, n_classes) softmax probabilities."""
    B, C, H, W = x_nchw.shape
    P = w_conv_p.shape[1]

    # NCHW -> (B*H*W, C): one tiny transpose HLO (~8 KiB); keeps the HW rows on
    # the sublane axis so the in-kernel pooling is a plain sublane reduction.
    x2d = jnp.transpose(x_nchw, (0, 2, 3, 1)).reshape(B * H * W, C)
    x2d = x2d.astype(jnp.float32)

    flops = 2 * B * H * W * C * P + 2 * B * 3 * P * P
    bytes_accessed = 4 * (x2d.size + w_conv_p.size + w_stack.size
                          + b_stack.size + B * P)
    cost = pl.CostEstimate(flops=flops, transcendentals=B * P,
                           bytes_accessed=bytes_accessed)

    vmem_spec = pl.BlockSpec(memory_space=pltpu.MemorySpace.VMEM)
    out = pl.pallas_call(
        fused_cnn_kernel,
        out_shape=jax.ShapeDtypeStruct((B, P), jnp.float32),
        in_specs=[vmem_spec, vmem_spec, vmem_spec, vmem_spec],
        out_specs=vmem_spec,
        cost_estimate=cost,
    )(x2d, w_conv_p, w_stack, b_stack)

    # x.view(-1, in_features) / Softmax(dim=1) semantics: strip class padding.
    return out[:, :n_classes]


# --------------------------- pure-JAX reference ------------------------------

def reference_forward(x_nchw, params):
    B, C, H, W = x_nchw.shape
    x2 = jnp.transpose(x_nchw, (0, 2, 3, 1)).reshape(B * H * W, C)
    y = jnp.clip(x2 @ params["w_conv"] + params["b_conv"], 0.0, 6.0)
    feats = jnp.mean(y.reshape(B, H * W, -1), axis=1)
    h = jnp.maximum(feats @ params["w1"] + params["b1"], 0.0)
    h = jnp.maximum(h @ params["w2"] + params["b2"], 0.0)
    logits = h @ params["w3"] + params["b3"]
    return jax.nn.softmax(logits, axis=1)


# --------------------------------- main ---------------------------------------

if __name__ == "__main__":
    # Small shapes consistent with the module's forward:
    #   input image (B, C, H, W), in_features, hidden dims, n_classes=9.
    B, C, H, W = 2, 4, 16, 16
    IN_FEATURES = 32                    # base_model.classifier[1].in_features (stand-in)
    HIDDEN = [64, 32]                   # list_neuronas_salida[1:3] with n_layers=4
    N_CLASSES = 9                       # len(class_to_index)

    key = jax.random.PRNGKey(0)
    kx, kc, k1, k2, k3, kb1, kb2, kb3 = jax.random.split(key, 8)

    x = jax.random.normal(kx, (B, C, H, W), dtype=jnp.float32)

    params = {
        # stand-in base_model feature extractor (1x1 conv weights, (C_in, F))
        "w_conv": jax.random.normal(kc, (C, IN_FEATURES), jnp.float32) * 0.1,
        "b_conv": jnp.zeros((1, IN_FEATURES), jnp.float32),
        # fc1: in_features -> HIDDEN[0]   (stored as (in, out) for x @ W)
        "w1": jax.random.normal(k1, (IN_FEATURES, HIDDEN[0]), jnp.float32) * 0.1,
        "b1": jax.random.normal(kb1, (1, HIDDEN[0]), jnp.float32) * 0.01,
        # fc2: HIDDEN[0] -> HIDDEN[1]
        "w2": jax.random.normal(k2, (HIDDEN[0], HIDDEN[1]), jnp.float32) * 0.1,
        "b2": jax.random.normal(kb2, (1, HIDDEN[1]), jnp.float32) * 0.01,
        # fc_final: HIDDEN[1] -> n_classes (followed by Softmax(dim=1))
        "w3": jax.random.normal(k3, (HIDDEN[1], N_CLASSES), jnp.float32) * 0.1,
        "b3": jax.random.normal(kb3, (1, N_CLASSES), jnp.float32) * 0.01,
    }

    # One-time weight prep, hoisted out of the per-call forward.
    w_conv_p, w_stack, b_stack, n_classes = prepare_params(params)
    jax.block_until_ready((w_conv_p, w_stack, b_stack))

    out = simple_cnn_forward(x, w_conv_p, w_stack, b_stack, n_classes=n_classes)
    out = jax.block_until_ready(out)

    assert out.shape == (B, N_CLASSES), out.shape
    # softmax rows sum to ~1, finite, and match the pure-JAX reference
    # (loose tolerance: approx reciprocal in the softmax epilogue).
    assert jnp.allclose(jnp.sum(out, axis=1), 1.0, atol=1e-2)
    assert bool(jnp.all(jnp.isfinite(out)))
    ref = reference_forward(x, params)
    assert jnp.allclose(out, ref, atol=1e-2, rtol=1e-2), (out, ref)
    print("KERNEL_OK")
</pallas_src>

<mosaic_0001>
module attributes {stable_mosaic.version = 11 : i64} {
  func.func @fused_cnn_kernel(%arg0: memref<512x4xf32, #tpu.memory_space<vmem>>, %arg1: memref<4x128xf32, #tpu.memory_space<vmem>>, %arg2: memref<3x128x128xf32, #tpu.memory_space<vmem>>, %arg3: memref<4x128xf32, #tpu.memory_space<vmem>>, %arg4: memref<2x128xf32, #tpu.memory_space<vmem>>) attributes {dimension_semantics = [], scalar_prefetch = 0 : i64, scratch_operands = 0 : i64, tpu.core_type = #tpu.core_type<tc>} {
    %c0 = arith.constant 0 : index
    %c0_0 = arith.constant 0 : index
    %0 = vector.load %arg0[%c0, %c0_0] : memref<512x4xf32, #tpu.memory_space<vmem>>, vector<512x4xf32>
    %c0_1 = arith.constant 0 : index
    %c0_2 = arith.constant 0 : index
    %1 = vector.load %arg1[%c0_1, %c0_2] : memref<4x128xf32, #tpu.memory_space<vmem>>, vector<4x128xf32>
    %cst = arith.constant dense<0.000000e+00> : vector<512x128xf32>
    %2 = tpu.matmul %0, %1, %cst {dimension_numbers = #tpu.dot_dimension_numbers<[1], [0], [0], [1], [0, 0, 1, 1], [], []>} : vector<512x4xf32>, vector<4x128xf32>, vector<512x128xf32> -> vector<512x128xf32>
    %c0_3 = arith.constant 0 : index
    %c0_4 = arith.constant 0 : index
    %3 = vector.load %arg3[%c0_3, %c0_4] : memref<4x128xf32, #tpu.memory_space<vmem>>, vector<1x128xf32>
    %4 = vector.broadcast %3 : vector<1x128xf32> to vector<512x128xf32>
    %5 = arith.addf %2, %4 : vector<512x128xf32>
    %cst_5 = arith.constant 0.000000e+00 : f32
    %cst_6 = arith.constant 6.000000e+00 : f32
    %6 = vector.broadcast %cst_5 : f32 to vector<512x128xf32>
    %7 = arith.maximumf %6, %5 : vector<512x128xf32>
    %8 = vector.broadcast %cst_6 : f32 to vector<512x128xf32>
    %9 = arith.minimumf %8, %7 : vector<512x128xf32>
    %10 = vector.shape_cast %9 : vector<512x128xf32> to vector<2x256x128xf32>
    %cst_7 = arith.constant dense<0.000000e+00> : vector<2x128xf32>
    %11 = vector.multi_reduction <add>, %10, %cst_7 [1] : vector<2x256x128xf32> to vector<2x128xf32>
    %cst_8 = arith.constant 2.560000e+02 : f32
    %12 = vector.broadcast %cst_8 : f32 to vector<2x128xf32>
    %13 = arith.divf %11, %12 : vector<2x128xf32>
    %c0_9 = arith.constant 0 : index
    %c0_10 = arith.constant 0 : index
    %c0_11 = arith.constant 0 : index
    %14 = vector.load %arg2[%c0_9, %c0_10, %c0_11] : memref<3x128x128xf32, #tpu.memory_space<vmem>>, vector<1x128x128xf32>
    %15 = vector.shape_cast %14 : vector<1x128x128xf32> to vector<128x128xf32>
    %cst_12 = arith.constant dense<0.000000e+00> : vector<2x128xf32>
    %16 = tpu.matmul %13, %15, %cst_12 {dimension_numbers = #tpu.dot_dimension_numbers<[1], [0], [0], [1], [0, 0, 1, 1], [], []>} : vector<2x128xf32>, vector<128x128xf32>, vector<2x128xf32> -> vector<2x128xf32>
    %c1 = arith.constant 1 : index
    %c0_13 = arith.constant 0 : index
    %17 = vector.load %arg3[%c1, %c0_13] : memref<4x128xf32, #tpu.memory_space<vmem>>, vector<1x128xf32>
    %18 = vector.broadcast %17 : vector<1x128xf32> to vector<2x128xf32>
    %19 = arith.addf %16, %18 : vector<2x128xf32>
    %cst_14 = arith.constant 0.000000e+00 : f32
    %20 = vector.broadcast %cst_14 : f32 to vector<2x128xf32>
    %21 = arith.maximumf %19, %20 : vector<2x128xf32>
    %c1_15 = arith.constant 1 : index
    %c0_16 = arith.constant 0 : index
    %c0_17 = arith.constant 0 : index
    %22 = vector.load %arg2[%c1_15, %c0_16, %c0_17] : memref<3x128x128xf32, #tpu.memory_space<vmem>>, vector<1x128x128xf32>
    %23 = vector.shape_cast %22 : vector<1x128x128xf32> to vector<128x128xf32>
    %cst_18 = arith.constant dense<0.000000e+00> : vector<2x128xf32>
    %24 = tpu.matmul %21, %23, %cst_18 {dimension_numbers = #tpu.dot_dimension_numbers<[1], [0], [0], [1], [0, 0, 1, 1], [], []>} : vector<2x128xf32>, vector<128x128xf32>, vector<2x128xf32> -> vector<2x128xf32>
    %c2 = arith.constant 2 : index
    %c0_19 = arith.constant 0 : index
    %25 = vector.load %arg3[%c2, %c0_19] : memref<4x128xf32, #tpu.memory_space<vmem>>, vector<1x128xf32>
    %26 = vector.broadcast %25 : vector<1x128xf32> to vector<2x128xf32>
    %27 = arith.addf %24, %26 : vector<2x128xf32>
    %cst_20 = arith.constant 0.000000e+00 : f32
    %28 = vector.broadcast %cst_20 : f32 to vector<2x128xf32>
    %29 = arith.maximumf %27, %28 : vector<2x128xf32>
    %c2_21 = arith.constant 2 : index
    %c0_22 = arith.constant 0 : index
    %c0_23 = arith.constant 0 : index
    %30 = vector.load %arg2[%c2_21, %c0_22, %c0_23] : memref<3x128x128xf32, #tpu.memory_space<vmem>>, vector<1x128x128xf32>
    %31 = vector.shape_cast %30 : vector<1x128x128xf32> to vector<128x128xf32>
    %cst_24 = arith.constant dense<0.000000e+00> : vector<2x128xf32>
    %32 = tpu.matmul %29, %31, %cst_24 {dimension_numbers = #tpu.dot_dimension_numbers<[1], [0], [0], [1], [0, 0, 1, 1], [], []>} : vector<2x128xf32>, vector<128x128xf32>, vector<2x128xf32> -> vector<2x128xf32>
    %c3 = arith.constant 3 : index
    %c0_25 = arith.constant 0 : index
    %33 = vector.load %arg3[%c3, %c0_25] : memref<4x128xf32, #tpu.memory_space<vmem>>, vector<1x128xf32>
    %34 = vector.broadcast %33 : vector<1x128xf32> to vector<2x128xf32>
    %35 = arith.addf %32, %34 : vector<2x128xf32>
    %cst_26 = arith.constant dense<0xFF800000> : vector<2xf32>
    %36 = vector.multi_reduction <maximumf>, %35, %cst_26 [1] : vector<2x128xf32> to vector<2xf32>
    %37 = vector.shape_cast %36 : vector<2xf32> to vector<2x1xf32>
    %38 = vector.broadcast %37 : vector<2x1xf32> to vector<2x128xf32>
    %39 = arith.subf %35, %38 : vector<2x128xf32>
    %40 = math.exp %39 : vector<2x128xf32>
    %cst_27 = arith.constant dense<0.000000e+00> : vector<2xf32>
    %41 = vector.multi_reduction <add>, %40, %cst_27 [1] : vector<2x128xf32> to vector<2xf32>
    %42 = vector.shape_cast %41 : vector<2xf32> to vector<2x1xf32>
    %43 = tpu.reciprocal %42 {approx = true} : vector<2x1xf32> -> vector<2x1xf32>
    %44 = vector.broadcast %43 : vector<2x1xf32> to vector<2x128xf32>
    %45 = arith.mulf %40, %44 : vector<2x128xf32>
    %c0_28 = arith.constant 0 : index
    %c0_29 = arith.constant 0 : index
    %46 = vector.load %arg4[%c0_28, %c0_29] : memref<2x128xf32, #tpu.memory_space<vmem>>, vector<2x128xf32>
    tpu.vector_store %arg4[%c0_28, %c0_29], %45 {strides = array<i32>} : memref<2x128xf32, #tpu.memory_space<vmem>>, vector<2x128xf32>,
    return
  }
}

</mosaic_0001>

<llo_original>
// kernel: simple_cnn_forward.1
$region0: #{simple_cnn_forward.1}
  #allocation0 [shape = 'u32[]', space=smem, size = 0x4, offset = 0x4, fixed_abs, tag = 'smem constant byte address 0x4 - core index']
  #allocation1 [shape = 'u32[144,128]{1,0:T(1,128)}', space=vmem, size = 0x12000, scoped, tag = 'internal scratch']
  %s0 = inlined_call_operand.vmem [shape: f32[512,4], index: 0, kind: input, shape index: {}]
  %s1 = inlined_call_operand.vmem [shape: f32[4,128], index: 1, kind: input, shape index: {}]
  %s2 = inlined_call_operand.vmem [shape: f32[3,128,128], index: 2, kind: input, shape index: {}]
  %s3 = inlined_call_operand.vmem [shape: f32[4,128], index: 3, kind: input, shape index: {}]
  %s4 = inlined_call_operand.hbm [shape: f32[2,128], index: 4, kind: output, shape index: {}]
  %s5 = sld [smem:[#allocation0]]
  $region26: #{simple_cnn_forward.1} parent=0
    _
  %s7 = ssub.s32 1, %s5
  %s8 = scalar_select 0, %s7, %s5
  $region1: #{simple_cnn_forward.1} parent=0
    #allocation2 [shape = 'u8[1024]{0}', space=vmem, size = 0x400, scoped, tag = 'output window, operand 0, single buffered']
    #allocation3 [shape = 's32[1]{0}', space=sflag, size = 0x4, scoped, tag = 'scoped memory for simple_cnn_forward.1']
    %9 = vsyncpa [#allocation3], 0
    // Predicated region
    $region2: #{simple_cnn_forward.1} parent=1 // pred_check
      _
    $region3: #{simple_cnn_forward.1} parent=1 // pred_check_branch
      %11 = sbr.rel (0) target = $region5
    $region4: #{simple_cnn_forward.1} parent=1 // pred_region
      _
    $region5: #{simple_cnn_forward.1} parent=1 // pred_fallthru
      _
    // Predicated region
    $region6: #{simple_cnn_forward.1} parent=1 // pred_check
      _
    $region7: #{simple_cnn_forward.1} parent=1 // pred_check_branch
      %13 = sbr.rel (0) target = $region9
    $region8: #{simple_cnn_forward.1} parent=1 // pred_region
      _
    $region9: #{simple_cnn_forward.1} parent=1 // pred_fallthru
      _
    // Predicated region
    $region10: #{simple_cnn_forward.1} parent=1 // pred_check
      _
    $region11: #{simple_cnn_forward.1} parent=1 // pred_check_branch
      %15 = sbr.rel (0) target = $region13
    $region12: #{simple_cnn_forward.1} parent=1 // pred_region
      _
    $region13: #{simple_cnn_forward.1} parent=1 // pred_fallthru
      _
    // Predicated region
    $region14: #{simple_cnn_forward.1} parent=1 // pred_check
      _
    $region15: #{simple_cnn_forward.1} parent=1 // pred_check_branch
      %17 = sbr.rel (0) target = $region17
    $region16: #{simple_cnn_forward.1} parent=1 // pred_region
      _
    $region17: #{simple_cnn_forward.1} parent=1 // pred_fallthru
      _
    %v18 = vld [vmem:[%s0] sm:$0xff]
    %v19 = vld [vmem:[%s0 + $0x8] sm:$0xff]
    %v20 = vld [vmem:[%s0 + $0x10] sm:$0xff]
    %v21 = vld [vmem:[%s0 + $0x18] sm:$0xff]
    %v22 = vld [vmem:[%s0 + $0x20] sm:$0xff]
    %v23 = vld [vmem:[%s0 + $0x28] sm:$0xff]
    %v24 = vld [vmem:[%s0 + $0x30] sm:$0xff]
    %v25 = vld [vmem:[%s0 + $0x38] sm:$0xff]
    %v26 = vld [vmem:[%s0 + $0x40] sm:$0xff]
    %v27 = vld [vmem:[%s0 + $0x48] sm:$0xff]
    %v28 = vld [vmem:[%s0 + $0x50] sm:$0xff]
    %v29 = vld [vmem:[%s0 + $0x58] sm:$0xff]
    %v30 = vld [vmem:[%s0 + $0x60] sm:$0xff]
    %v31 = vld [vmem:[%s0 + $0x68] sm:$0xff]
    %v32 = vld [vmem:[%s0 + $0x70] sm:$0xff]
    %v33 = vld [vmem:[%s0 + $0x78] sm:$0xff]
    %v34 = vld [vmem:[%s0 + $0x80] sm:$0xff]
    %v35 = vld [vmem:[%s0 + $0x88] sm:$0xff]
    %v36 = vld [vmem:[%s0 + $0x90] sm:$0xff]
    %v37 = vld [vmem:[%s0 + $0x98] sm:$0xff]
    %v38 = vld [vmem:[%s0 + $0xa0] sm:$0xff]
    %v39 = vld [vmem:[%s0 + $0xa8] sm:$0xff]
    %v40 = vld [vmem:[%s0 + $0xb0] sm:$0xff]
    %v41 = vld [vmem:[%s0 + $0xb8] sm:$0xff]
    %v42 = vld [vmem:[%s0 + $0xc0] sm:$0xff]
    %v43 = vld [vmem:[%s0 + $0xc8] sm:$0xff]
    %v44 = vld [vmem:[%s0 + $0xd0] sm:$0xff]
    %v45 = vld [vmem:[%s0 + $0xd8] sm:$0xff]
    %v46 = vld [vmem:[%s0 + $0xe0] sm:$0xff]
    %v47 = vld [vmem:[%s0 + $0xe8] sm:$0xff]
    %v48 = vld [vmem:[%s0 + $0xf0] sm:$0xff]
    %v49 = vld [vmem:[%s0 + $0xf8] sm:$0xff]
    %v50 = vld [vmem:[%s0 + $0x100] sm:$0xff]
    %v51 = vld [vmem:[%s0 + $0x108] sm:$0xff]
    %v52 = vld [vmem:[%s0 + $0x110] sm:$0xff]
    %v53 = vld [vmem:[%s0 + $0x118] sm:$0xff]
    %v54 = vld [vmem:[%s0 + $0x120] sm:$0xff]
    %v55 = vld [vmem:[%s0 + $0x128] sm:$0xff]
    %v56 = vld [vmem:[%s0 + $0x130] sm:$0xff]
    %v57 = vld [vmem:[%s0 + $0x138] sm:$0xff]
    %v58 = vld [vmem:[%s0 + $0x140] sm:$0xff]
    %v59 = vld [vmem:[%s0 + $0x148] sm:$0xff]
    %v60 = vld [vmem:[%s0 + $0x150] sm:$0xff]
    %v61 = vld [vmem:[%s0 + $0x158] sm:$0xff]
    %v62 = vld [vmem:[%s0 + $0x160] sm:$0xff]
    %v63 = vld [vmem:[%s0 + $0x168] sm:$0xff]
    %v64 = vld [vmem:[%s0 + $0x170] sm:$0xff]
    %v65 = vld [vmem:[%s0 + $0x178] sm:$0xff]
    %v66 = vld [vmem:[%s0 + $0x180] sm:$0xff]
    %v67 = vld [vmem:[%s0 + $0x188] sm:$0xff]
    %v68 = vld [vmem:[%s0 + $0x190] sm:$0xff]
    %v69 = vld [vmem:[%s0 + $0x198] sm:$0xff]
    %v70 = vld [vmem:[%s0 + $0x1a0] sm:$0xff]
    %v71 = vld [vmem:[%s0 + $0x1a8] sm:$0xff]
    %v72 = vld [vmem:[%s0 + $0x1b0] sm:$0xff]
    %v73 = vld [vmem:[%s0 + $0x1b8] sm:$0xff]
    %v74 = vld [vmem:[%s0 + $0x1c0] sm:$0xff]
    %v75 = vld [vmem:[%s0 + $0x1c8] sm:$0xff]
    %v76 = vld [vmem:[%s0 + $0x1d0] sm:$0xff]
    %v77 = vld [vmem:[%s0 + $0x1d8] sm:$0xff]
    %v78 = vld [vmem:[%s0 + $0x1e0] sm:$0xff]
    %v79 = vld [vmem:[%s0 + $0x1e8] sm:$0xff]
    %v80 = vld [vmem:[%s0 + $0x1f0] sm:$0xff]
    %v81 = vld [vmem:[%s0 + $0x1f8] sm:$0xff]
    %v82 = vld [vmem:[%s1] sm:$0xf]
    %v83 = vld [vmem:[%s3] sm:$0x1]
    %v84 = vlaneseq
    %v85 = vshrl.u32 %v84, 7
    %v86 = vsub.s32 0, %v85
    %v87 = vrot.slane %v83, %v86
    %vm88 = vcmask 31744
    %v90 = vsel %vm88, %v18, 0
    %v93 = vsel %vm88, %v19, 0
    %v96 = vsel %vm88, %v20, 0
    %v99 = vsel %vm88, %v21, 0
    %v102 = vsel %vm88, %v22, 0
    %v105 = vsel %vm88, %v23, 0
    %v108 = vsel %vm88, %v24, 0
    %v111 = vsel %vm88, %v25, 0
    %v114 = vsel %vm88, %v26, 0
    %v117 = vsel %vm88, %v27, 0
    %v120 = vsel %vm88, %v28, 0
    %v123 = vsel %vm88, %v29, 0
    %v126 = vsel %vm88, %v30, 0
    %v129 = vsel %vm88, %v31, 0
    %v132 = vsel %vm88, %v32, 0
    %v135 = vsel %vm88, %v33, 0
    %v138 = vsel %vm88, %v34, 0
    %v141 = vsel %vm88, %v35, 0
    %v144 = vsel %vm88, %v36, 0
    %v147 = vsel %vm88, %v37, 0
    %v150 = vsel %vm88, %v38, 0
    %v153 = vsel %vm88, %v39, 0
    %v156 = vsel %vm88, %v40, 0
    %v159 = vsel %vm88, %v41, 0
    %v162 = vsel %vm88, %v42, 0
    %v165 = vsel %vm88, %v43, 0
    %v168 = vsel %vm88, %v44, 0
    %v171 = vsel %vm88, %v45, 0
    %v174 = vsel %vm88, %v46, 0
    %v177 = vsel %vm88, %v47, 0
    %v180 = vsel %vm88, %v48, 0
    %v183 = vsel %vm88, %v49, 0
    %v186 = vsel %vm88, %v50, 0
    %v189 = vsel %vm88, %v51, 0
    %v192 = vsel %vm88, %v52, 0
    %v195 = vsel %vm88, %v53, 0
    %v198 = vsel %vm88, %v54, 0
    %v201 = vsel %vm88, %v55, 0
    %v204 = vsel %vm88, %v56, 0
    %v207 = vsel %vm88, %v57, 0
    %v210 = vsel %vm88, %v58, 0
    %v213 = vsel %vm88, %v59, 0
    %v216 = vsel %vm88, %v60, 0
    %v219 = vsel %vm88, %v61, 0
    %v222 = vsel %vm88, %v62, 0
    %v225 = vsel %vm88, %v63, 0
    %v228 = vsel %vm88, %v64, 0
    %v231 = vsel %vm88, %v65, 0
    %v234 = vsel %vm88, %v66, 0
    %v237 = vsel %vm88, %v67, 0
    %v240 = vsel %vm88, %v68, 0
    %v243 = vsel %vm88, %v69, 0
    %v246 = vsel %vm88, %v70, 0
    %v249 = vsel %vm88, %v71, 0
    %v252 = vsel %vm88, %v72, 0
    %v255 = vsel %vm88, %v73, 0
    %v258 = vsel %vm88, %v74, 0
    %v261 = vsel %vm88, %v75, 0
    %v264 = vsel %vm88, %v76, 0
    %v267 = vsel %vm88, %v77, 0
    %v270 = vsel %vm88, %v78, 0
    %v273 = vsel %vm88, %v79, 0
    %v276 = vsel %vm88, %v80, 0
    %v279 = vsel %vm88, %v81, 0
    %vm281 = vcmask 1043456
    %v283 = vsel %vm281, %v82, 0
    %285 = vmatprep.subr.mxu0 0.0
    %286 = vmatpush1.msra.mxu0 %v283
    %287 = vmatprep.subr.mxu0 0.0
    %288 = vmatpush1.msra.mxu0 0.0
    %289 = vmatprep.subr.mxu0 0.0
    %290 = vmatpush1.msra.mxu0 0.0
    %291 = vmatprep.subr.mxu0 0.0
    %292 = vmatpush1.msra.mxu0 0.0
    %293 = vmatprep.subr.mxu0 0.0
    %294 = vmatpush1.msra.mxu0 0.0
    %295 = vmatprep.subr.mxu0 0.0
    %296 = vmatpush1.msra.mxu0 0.0
    %297 = vmatprep.subr.mxu0 0.0
    %298 = vmatpush1.msra.mxu0 0.0
    %299 = vmatprep.subr.mxu0 0.0
    %300 = vmatpush1.msra.mxu0 0.0
    %301 = vmatprep.subr.mxu0 0.0
    %302 = vmatpush1.msra.mxu0 0.0
    %303 = vmatprep.subr.mxu0 0.0
    %304 = vmatpush1.msra.mxu0 0.0
    %305 = vmatprep.subr.mxu0 0.0
    %306 = vmatpush1.msra.mxu0 0.0
    %307 = vmatprep.subr.mxu0 0.0
    %308 = vmatpush1.msra.mxu0 0.0
    %309 = vmatprep.subr.mxu0 0.0
    %310 = vmatpush1.msra.mxu0 0.0
    %311 = vmatprep.subr.mxu0 0.0
    %312 = vmatpush1.msra.mxu0 0.0
    %313 = vmatprep.subr.mxu0 0.0
    %314 = vmatpush1.msra.mxu0 0.0
    %315 = vmatprep.subr.mxu0 0.0
    %316 = vmatpush1.msra.mxu0 0.0
    %317 = vmatprep.subr.mxu0 0.0
    %318 = vmatpush1.msra.mxu0 0.0
    %319 = vmatprep.subr.mxu0 0.0
    %320 = vmatpush1.msra.mxu0 0.0
    %321 = vmatprep.subr.mxu0 0.0
    %322 = vmatpush1.msra.mxu0 0.0
    %323 = vmatprep.subr.mxu0 0.0
    %324 = vmatpush1.msra.mxu0 0.0
    %325 = vmatprep.subr.mxu0 0.0
    %326 = vmatpush1.msra.mxu0 0.0
    %327 = vmatprep.subr.mxu0 0.0
    %328 = vmatpush1.msra.mxu0 0.0
    %329 = vmatprep.subr.mxu0 0.0
    %330 = vmatpush1.msra.mxu0 0.0
    %331 = vmatprep.subr.mxu0 0.0
    %332 = vmatpush1.msra.mxu0 0.0
    %333 = vmatprep.subr.mxu0 0.0
    %334 = vmatpush1.msra.mxu0 0.0
    %335 = vmatprep.subr.mxu0 0.0
    %336 = vmatpush1.msra.mxu0 0.0
    %337 = vmatprep.subr.mxu0 0.0
    %338 = vmatpush1.msra.mxu0 0.0
    %339 = vmatprep.subr.mxu0 0.0
    %340 = vmatpush1.msra.mxu0 0.0
    %341 = vmatprep.subr.mxu0 0.0
    %342 = vmatpush1.msra.mxu0 0.0
    %343 = vmatprep.subr.mxu0 0.0
    %344 = vmatpush1.msra.mxu0 0.0
    %345 = vmatprep.subr.mxu0 0.0
    %346 = vmatpush1.msra.mxu0 0.0
    %347 = vmatprep.subr.mxu0 0.0
    %348 = vmatpush1.msra.mxu0 0.0
    %349 = vmatprep.mubr.f32.mxu0 0.0
    %350 = vmatmul.mubr.f32.gmra.mrb[0].mxu0 %v90
    %v351 = vpop.f32.mrb[0].mxu0
    %v352 = vadd.f32 %v87, %v351
    %v353 = vpop.f32.mrb[0].mxu0
    %354 = vmatprep.mubr.f32.mxu0 0.0
    %355 = vmatmul.mubr.f32.gmra.mrb[0].mxu0 %v93
    %v356 = vpop.f32.mrb[0].mxu0
    %v357 = vadd.f32 %v87, %v356
    %v358 = vpop.f32.mrb[0].mxu0
    %359 = vmatprep.mubr.f32.mxu0 0.0
    %360 = vmatmul.mubr.f32.gmra.mrb[0].mxu0 %v96
    %v361 = vpop.f32.mrb[0].mxu0
    %v362 = vadd.f32 %v87, %v361
    %v363 = vpop.f32.mrb[0].mxu0
    %364 = vmatprep.mubr.f32.mxu0 0.0
    %365 = vmatmul.mubr.f32.gmra.mrb[0].mxu0 %v99
    %v366 = vpop.f32.mrb[0].mxu0
    %v367 = vadd.f32 %v87, %v366
    %v368 = vpop.f32.mrb[0].mxu0
    %369 = vmatprep.mubr.f32.mxu0 0.0
    %370 = vmatmul.mubr.f32.gmra.mrb[0].mxu0 %v102
    %v371 = vpop.f32.mrb[0].mxu0
    %v372 = vadd.f32 %v87, %v371
    %v373 = vpop.f32.mrb[0].mxu0
    %374 = vmatprep.mubr.f32.mxu0 0.0
    %375 = vmatmul.mubr.f32.gmra.mrb[0].mxu0 %v105
    %v376 = vpop.f32.mrb[0].mxu0
    %v377 = vadd.f32 %v87, %v376
    %v378 = vpop.f32.mrb[0].mxu0
    %379 = vmatprep.mubr.f32.mxu0 0.0
    %380 = vmatmul.mubr.f32.gmra.mrb[0].mxu0 %v108
    %v381 = vpop.f32.mrb[0].mxu0
    %v382 = vadd.f32 %v87, %v381
    %v383 = vpop.f32.mrb[0].mxu0
    %384 = vmatprep.mubr.f32.mxu0 0.0
    %385 = vmatmul.mubr.f32.gmra.mrb[0].mxu0 %v111
    %v386 = vpop.f32.mrb[0].mxu0
    %v387 = vadd.f32 %v87, %v386
    %v388 = vpop.f32.mrb[0].mxu0
    %389 = vmatprep.mubr.f32.mxu0 0.0
    %390 = vmatmul.mubr.f32.gmra.mrb[0].mxu0 %v114
    %v391 = vpop.f32.mrb[0].mxu0
    %v392 = vadd.f32 %v87, %v391
    %v393 = vpop.f32.mrb[0].mxu0
    %394 = vmatprep.mubr.f32.mxu0 0.0
    %395 = vmatmul.mubr.f32.gmra.mrb[0].mxu0 %v117
    %v396 = vpop.f32.mrb[0].mxu0
    %v397 = vadd.f32 %v87, %v396
    %v398 = vpop.f32.mrb[0].mxu0
    %399 = vmatprep.mubr.f32.mxu0 0.0
    %400 = vmatmul.mubr.f32.gmra.mrb[0].mxu0 %v120
    %v401 = vpop.f32.mrb[0].mxu0
    %v402 = vadd.f32 %v87, %v401
    %v403 = vpop.f32.mrb[0].mxu0
    %404 = vmatprep.mubr.f32.mxu0 0.0
    %405 = vmatmul.mubr.f32.gmra.mrb[0].mxu0 %v123
    %v406 = vpop.f32.mrb[0].mxu0
    %v407 = vadd.f32 %v87, %v406
    %v408 = vpop.f32.mrb[0].mxu0
    %409 = vmatprep.mubr.f32.mxu0 0.0
    %410 = vmatmul.mubr.f32.gmra.mrb[0].mxu0 %v126
    %v411 = vpop.f32.mrb[0].mxu0
    %v412 = vadd.f32 %v87, %v411
    %v413 = vpop.f32.mrb[0].mxu0
    %414 = vmatprep.mubr.f32.mxu0 0.0
    %415 = vmatmul.mubr.f32.gmra.mrb[0].mxu0 %v129
    %v416 = vpop.f32.mrb[0].mxu0
    %v417 = vadd.f32 %v87, %v416
    %v418 = vpop.f32.mrb[0].mxu0
    %419 = vmatprep.mubr.f32.mxu0 0.0
    %420 = vmatmul.mubr.f32.gmra.mrb[0].mxu0 %v132
    %v421 = vpop.f32.mrb[0].mxu0
    %v422 = vadd.f32 %v87, %v421
    %v423 = vpop.f32.mrb[0].mxu0
    %424 = vmatprep.mubr.f32.mxu0 0.0
    %425 = vmatmul.mubr.f32.gmra.mrb[0].mxu0 %v135
    %v426 = vpop.f32.mrb[0].mxu0
    %v427 = vadd.f32 %v87, %v426
    %v428 = vpop.f32.mrb[0].mxu0
    %429 = vmatprep.mubr.f32.mxu0 0.0
    %430 = vmatmul.mubr.f32.gmra.mrb[0].mxu0 %v138
    %v431 = vpop.f32.mrb[0].mxu0
    %v432 = vadd.f32 %v87, %v431
    %v433 = vpop.f32.mrb[0].mxu0
    %434 = vmatprep.mubr.f32.mxu0 0.0
    %435 = vmatmul.mubr.f32.gmra.mrb[0].mxu0 %v141
    %v436 = vpop.f32.mrb[0].mxu0
    %v437 = vadd.f32 %v87, %v436
    %v438 = vpop.f32.mrb[0].mxu0
    %439 = vmatprep.mubr.f32.mxu0 0.0
    %440 = vmatmul.mubr.f32.gmra.mrb[0].mxu0 %v144
    %v441 = vpop.f32.mrb[0].mxu0
    %v442 = vadd.f32 %v87, %v441
    %v443 = vpop.f32.mrb[0].mxu0
    %444 = vmatprep.mubr.f32.mxu0 0.0
    %445 = vmatmul.mubr.f32.gmra.mrb[0].mxu0 %v147
    %v446 = vpop.f32.mrb[0].mxu0
    %v447 = vadd.f32 %v87, %v446
    %v448 = vpop.f32.mrb[0].mxu0
    %449 = vmatprep.mubr.f32.mxu0 0.0
    %450 = vmatmul.mubr.f32.gmra.mrb[0].mxu0 %v150
    %v451 = vpop.f32.mrb[0].mxu0
    %v452 = vadd.f32 %v87, %v451
    %v453 = vpop.f32.mrb[0].mxu0
    %454 = vmatprep.mubr.f32.mxu0 0.0
    %455 = vmatmul.mubr.f32.gmra.mrb[0].mxu0 %v153
    %v456 = vpop.f32.mrb[0].mxu0
    %v457 = vadd.f32 %v87, %v456
    %v458 = vpop.f32.mrb[0].mxu0
    %459 = vmatprep.mubr.f32.mxu0 0.0
    %460 = vmatmul.mubr.f32.gmra.mrb[0].mxu0 %v156
    %v461 = vpop.f32.mrb[0].mxu0
    %v462 = vadd.f32 %v87, %v461
    %v463 = vpop.f32.mrb[0].mxu0
    %464 = vmatprep.mubr.f32.mxu0 0.0
    %465 = vmatmul.mubr.f32.gmra.mrb[0].mxu0 %v159
    %v466 = vpop.f32.mrb[0].mxu0
    %v467 = vadd.f32 %v87, %v466
    %v468 = vpop.f32.mrb[0].mxu0
    %469 = vmatprep.mubr.f32.mxu0 0.0
    %470 = vmatmul.mubr.f32.gmra.mrb[0].mxu0 %v162
    %v471 = vpop.f32.mrb[0].mxu0
    %v472 = vadd.f32 %v87, %v471
    %v473 = vpop.f32.mrb[0].mxu0
    %474 = vmatprep.mubr.f32.mxu0 0.0
    %475 = vmatmul.mubr.f32.gmra.mrb[0].mxu0 %v165
    %v476 = vpop.f32.mrb[0].mxu0
    %v477 = vadd.f32 %v87, %v476
    %v478 = vpop.f32.mrb[0].mxu0
    %479 = vmatprep.mubr.f32.mxu0 0.0
    %480 = vmatmul.mubr.f32.gmra.mrb[0].mxu0 %v168
    %v481 = vpop.f32.mrb[0].mxu0
    %v482 = vadd.f32 %v87, %v481
    %v483 = vpop.f32.mrb[0].mxu0
    %484 = vmatprep.mubr.f32.mxu0 0.0
    %485 = vmatmul.mubr.f32.gmra.mrb[0].mxu0 %v171
    %v486 = vpop.f32.mrb[0].mxu0
    %v487 = vadd.f32 %v87, %v486
    %v488 = vpop.f32.mrb[0].mxu0
    %489 = vmatprep.mubr.f32.mxu0 0.0
    %490 = vmatmul.mubr.f32.gmra.mrb[0].mxu0 %v174
    %v491 = vpop.f32.mrb[0].mxu0
    %v492 = vadd.f32 %v87, %v491
    %v493 = vpop.f32.mrb[0].mxu0
    %494 = vmatprep.mubr.f32.mxu0 0.0
    %495 = vmatmul.mubr.f32.gmra.mrb[0].mxu0 %v177
    %v496 = vpop.f32.mrb[0].mxu0
    %v497 = vadd.f32 %v87, %v496
    %v498 = vpop.f32.mrb[0].mxu0
    %499 = vmatprep.mubr.f32.mxu0 0.0
    %500 = vmatmul.mubr.f32.gmra.mrb[0].mxu0 %v180
    %v501 = vpop.f32.mrb[0].mxu0
    %v502 = vadd.f32 %v87, %v501
    %v503 = vpop.f32.mrb[0].mxu0
    %504 = vmatprep.mubr.f32.mxu0 0.0
    %505 = vmatmul.mubr.f32.gmra.mrb[0].mxu0 %v183
    %v506 = vpop.f32.mrb[0].mxu0
    %v507 = vadd.f32 %v87, %v506
    %v508 = vpop.f32.mrb[0].mxu0
    %509 = vmatprep.mubr.f32.mxu0 0.0
    %510 = vmatmul.mubr.f32.gmra.mrb[0].mxu0 %v186
    %v511 = vpop.f32.mrb[0].mxu0
    %v512 = vadd.f32 %v87, %v511
    %v513 = vpop.f32.mrb[0].mxu0
    %514 = vmatprep.mubr.f32.mxu0 0.0
    %515 = vmatmul.mubr.f32.gmra.mrb[0].mxu0 %v189
    %v516 = vpop.f32.mrb[0].mxu0
    %v517 = vadd.f32 %v87, %v516
    %v518 = vpop.f32.mrb[0].mxu0
    %519 = vmatprep.mubr.f32.mxu0 0.0
    %520 = vmatmul.mubr.f32.gmra.mrb[0].mxu0 %v192
    %v521 = vpop.f32.mrb[0].mxu0
    %v522 = vadd.f32 %v87, %v521
    %v523 = vpop.f32.mrb[0].mxu0
    %524 = vmatprep.mubr.f32.mxu0 0.0
    %525 = vmatmul.mubr.f32.gmra.mrb[0].mxu0 %v195
    %v526 = vpop.f32.mrb[0].mxu0
    %v527 = vadd.f32 %v87, %v526
    %v528 = vpop.f32.mrb[0].mxu0
    %529 = vmatprep.mubr.f32.mxu0 0.0
    %530 = vmatmul.mubr.f32.gmra.mrb[0].mxu0 %v198
    %v531 = vpop.f32.mrb[0].mxu0
    %v532 = vadd.f32 %v87, %v531
    %v533 = vpop.f32.mrb[0].mxu0
    %534 = vmatprep.mubr.f32.mxu0 0.0
    %535 = vmatmul.mubr.f32.gmra.mrb[0].mxu0 %v201
    %v536 = vpop.f32.mrb[0].mxu0
    %v537 = vadd.f32 %v87, %v536
    %v538 = vpop.f32.mrb[0].mxu0
    %539 = vmatprep.mubr.f32.mxu0 0.0
    %540 = vmatmul.mubr.f32.gmra.mrb[0].mxu0 %v204
    %v541 = vpop.f32.mrb[0].mxu0
    %v542 = vadd.f32 %v87, %v541
    %v543 = vpop.f32.mrb[0].mxu0
    %544 = vmatprep.mubr.f32.mxu0 0.0
    %545 = vmatmul.mubr.f32.gmra.mrb[0].mxu0 %v207
    %v546 = vpop.f32.mrb[0].mxu0
    %v547 = vadd.f32 %v87, %v546
    %v548 = vpop.f32.mrb[0].mxu0
    %549 = vmatprep.mubr.f32.mxu0 0.0
    %550 = vmatmul.mubr.f32.gmra.mrb[0].mxu0 %v210
    %v551 = vpop.f32.mrb[0].mxu0
    %v552 = vadd.f32 %v87, %v551
    %v553 = vpop.f32.mrb[0].mxu0
    %554 = vmatprep.mubr.f32.mxu0 0.0
    %555 = vmatmul.mubr.f32.gmra.mrb[0].mxu0 %v213
    %v556 = vpop.f32.mrb[0].mxu0
    %v557 = vadd.f32 %v87, %v556
    %v558 = vpop.f32.mrb[0].mxu0
    %559 = vmatprep.mubr.f32.mxu0 0.0
    %560 = vmatmul.mubr.f32.gmra.mrb[0].mxu0 %v216
    %v561 = vpop.f32.mrb[0].mxu0
    %v562 = vadd.f32 %v87, %v561
    %v563 = vpop.f32.mrb[0].mxu0
    %564 = vmatprep.mubr.f32.mxu0 0.0
    %565 = vmatmul.mubr.f32.gmra.mrb[0].mxu0 %v219
    %v566 = vpop.f32.mrb[0].mxu0
    %v567 = vadd.f32 %v87, %v566
    %v568 = vpop.f32.mrb[0].mxu0
    %569 = vmatprep.mubr.f32.mxu0 0.0
    %570 = vmatmul.mubr.f32.gmra.mrb[0].mxu0 %v222
    %v571 = vpop.f32.mrb[0].mxu0
    %v572 = vadd.f32 %v87, %v571
    %v573 = vpop.f32.mrb[0].mxu0
    %574 = vmatprep.mubr.f32.mxu0 0.0
    %575 = vmatmul.mubr.f32.gmra.mrb[0].mxu0 %v225
    %v576 = vpop.f32.mrb[0].mxu0
    %v577 = vadd.f32 %v87, %v576
    %v578 = vpop.f32.mrb[0].mxu0
    %579 = vmatprep.mubr.f32.mxu0 0.0
    %580 = vmatmul.mubr.f32.gmra.mrb[0].mxu0 %v228
    %v581 = vpop.f32.mrb[0].mxu0
    %v582 = vadd.f32 %v87, %v581
    %v583 = vpop.f32.mrb[0].mxu0
    %584 = vmatprep.mubr.f32.mxu0 0.0
    %585 = vmatmul.mubr.f32.gmra.mrb[0].mxu0 %v231
    %v586 = vpop.f32.mrb[0].mxu0
    %v587 = vadd.f32 %v87, %v586
    %v588 = vpop.f32.mrb[0].mxu0
    %589 = vmatprep.mubr.f32.mxu0 0.0
    %590 = vmatmul.mubr.f32.gmra.mrb[0].mxu0 %v234
    %v591 = vpop.f32.mrb[0].mxu0
    %v592 = vadd.f32 %v87, %v591
    %v593 = vpop.f32.mrb[0].mxu0
    %594 = vmatprep.mubr.f32.mxu0 0.0
    %595 = vmatmul.mubr.f32.gmra.mrb[0].mxu0 %v237
    %v596 = vpop.f32.mrb[0].mxu0
    %v597 = vadd.f32 %v87, %v596
    %v598 = vpop.f32.mrb[0].mxu0
    %599 = vmatprep.mubr.f32.mxu0 0.0
    %600 = vmatmul.mubr.f32.gmra.mrb[0].mxu0 %v240
    %v601 = vpop.f32.mrb[0].mxu0
    %v602 = vadd.f32 %v87, %v601
    %v603 = vpop.f32.mrb[0].mxu0
    %604 = vmatprep.mubr.f32.mxu0 0.0
    %605 = vmatmul.mubr.f32.gmra.mrb[0].mxu0 %v243
    %v606 = vpop.f32.mrb[0].mxu0
    %v607 = vadd.f32 %v87, %v606
    %v608 = vpop.f32.mrb[0].mxu0
    %609 = vmatprep.mubr.f32.mxu0 0.0
    %610 = vmatmul.mubr.f32.gmra.mrb[0].mxu0 %v246
    %v611 = vpop.f32.mrb[0].mxu0
    %v612 = vadd.f32 %v87, %v611
    %v613 = vpop.f32.mrb[0].mxu0
    %614 = vmatprep.mubr.f32.mxu0 0.0
    %615 = vmatmul.mubr.f32.gmra.mrb[0].mxu0 %v249
    %v616 = vpop.f32.mrb[0].mxu0
    %v617 = vadd.f32 %v87, %v616
    %v618 = vpop.f32.mrb[0].mxu0
    %619 = vmatprep.mubr.f32.mxu0 0.0
    %620 = vmatmul.mubr.f32.gmra.mrb[0].mxu0 %v252
    %v621 = vpop.f32.mrb[0].mxu0
    %v622 = vadd.f32 %v87, %v621
    %v623 = vpop.f32.mrb[0].mxu0
    %624 = vmatprep.mubr.f32.mxu0 0.0
    %625 = vmatmul.mubr.f32.gmra.mrb[0].mxu0 %v255
    %v626 = vpop.f32.mrb[0].mxu0
    %v627 = vadd.f32 %v87, %v626
    %v628 = vpop.f32.mrb[0].mxu0
    %629 = vmatprep.mubr.f32.mxu0 0.0
    %630 = vmatmul.mubr.f32.gmra.mrb[0].mxu0 %v258
    %v631 = vpop.f32.mrb[0].mxu0
    %v632 = vadd.f32 %v87, %v631
    %v633 = vpop.f32.mrb[0].mxu0
    %634 = vmatprep.mubr.f32.mxu0 0.0
    %635 = vmatmul.mubr.f32.gmra.mrb[0].mxu0 %v261
    %v636 = vpop.f32.mrb[0].mxu0
    %v637 = vadd.f32 %v87, %v636
    %v638 = vpop.f32.mrb[0].mxu0
    %639 = vmatprep.mubr.f32.mxu0 0.0
    %640 = vmatmul.mubr.f32.gmra.mrb[0].mxu0 %v264
    %v641 = vpop.f32.mrb[0].mxu0
    %v642 = vadd.f32 %v87, %v641
    %v643 = vpop.f32.mrb[0].mxu0
    %644 = vmatprep.mubr.f32.mxu0 0.0
    %645 = vmatmul.mubr.f32.gmra.mrb[0].mxu0 %v267
    %v646 = vpop.f32.mrb[0].mxu0
    %v647 = vadd.f32 %v87, %v646
    %v648 = vpop.f32.mrb[0].mxu0
    %649 = vmatprep.mubr.f32.mxu0 0.0
    %650 = vmatmul.mubr.f32.gmra.mrb[0].mxu0 %v270
    %v651 = vpop.f32.mrb[0].mxu0
    %v652 = vadd.f32 %v87, %v651
    %v653 = vpop.f32.mrb[0].mxu0
    %654 = vmatprep.mubr.f32.mxu0 0.0
    %655 = vmatmul.mubr.f32.gmra.mrb[0].mxu0 %v273
    %v656 = vpop.f32.mrb[0].mxu0
    %v657 = vadd.f32 %v87, %v656
    %v658 = vpop.f32.mrb[0].mxu0
    %659 = vmatprep.mubr.f32.mxu0 0.0
    %660 = vmatmul.mubr.f32.gmra.mrb[0].mxu0 %v276
    %v661 = vpop.f32.mrb[0].mxu0
    %v662 = vadd.f32 %v87, %v661
    %v663 = vpop.f32.mrb[0].mxu0
    %664 = vmatprep.mubr.f32.mxu0 0.0
    %665 = vmatmul.mubr.f32.gmra.mrb[0].mxu0 %v279
    %v666 = vpop.f32.mrb[0].mxu0
    %v667 = vadd.f32 %v87, %v666
    %v668 = vpop.f32.mrb[0].mxu0
    %669 = vdwg.mxu0
    %v670 = vmax.f32 %v352, 0.0
    %v671 = vmax.f32 %v357, 0.0
    %v672 = vmax.f32 %v362, 0.0
    %v673 = vmax.f32 %v367, 0.0
    %v674 = vmax.f32 %v372, 0.0
    %v675 = vmax.f32 %v377, 0.0
    %v676 = vmax.f32 %v382, 0.0
    %v677 = vmax.f32 %v387, 0.0
    %v678 = vmax.f32 %v392, 0.0
    %v679 = vmax.f32 %v397, 0.0
    %v680 = vmax.f32 %v402, 0.0
    %v681 = vmax.f32 %v407, 0.0
    %v682 = vmax.f32 %v412, 0.0
    %v683 = vmax.f32 %v417, 0.0
    %v684 = vmax.f32 %v422, 0.0
    %v685 = vmax.f32 %v427, 0.0
    %v686 = vmax.f32 %v432, 0.0
    %v687 = vmax.f32 %v437, 0.0
    %v688 = vmax.f32 %v442, 0.0
    %v689 = vmax.f32 %v447, 0.0
    %v690 = vmax.f32 %v452, 0.0
    %v691 = vmax.f32 %v457, 0.0
    %v692 = vmax.f32 %v462, 0.0
    %v693 = vmax.f32 %v467, 0.0
    %v694 = vmax.f32 %v472, 0.0
    %v695 = vmax.f32 %v477, 0.0
    %v696 = vmax.f32 %v482, 0.0
    %v697 = vmax.f32 %v487, 0.0
    %v698 = vmax.f32 %v492, 0.0
    %v699 = vmax.f32 %v497, 0.0
    %v700 = vmax.f32 %v502, 0.0
    %v701 = vmax.f32 %v507, 0.0
    %v702 = vmax.f32 %v512, 0.0
    %v703 = vmax.f32 %v517, 0.0
    %v704 = vmax.f32 %v522, 0.0
    %v705 = vmax.f32 %v527, 0.0
    %v706 = vmax.f32 %v532, 0.0
    %v707 = vmax.f32 %v537, 0.0
    %v708 = vmax.f32 %v542, 0.0
    %v709 = vmax.f32 %v547, 0.0
    %v710 = vmax.f32 %v552, 0.0
    %v711 = vmax.f32 %v557, 0.0
    %v712 = vmax.f32 %v562, 0.0
    %v713 = vmax.f32 %v567, 0.0
    %v714 = vmax.f32 %v572, 0.0
    %v715 = vmax.f32 %v577, 0.0
    %v716 = vmax.f32 %v582, 0.0
    %v717 = vmax.f32 %v587, 0.0
    %v718 = vmax.f32 %v592, 0.0
    %v719 = vmax.f32 %v597, 0.0
    %v720 = vmax.f32 %v602, 0.0
    %v721 = vmax.f32 %v607, 0.0
    %v722 = vmax.f32 %v612, 0.0
    %v723 = vmax.f32 %v617, 0.0
    %v724 = vmax.f32 %v622, 0.0
    %v725 = vmax.f32 %v627, 0.0
    %v726 = vmax.f32 %v632, 0.0
    %v727 = vmax.f32 %v637, 0.0
    %v728 = vmax.f32 %v642, 0.0
    %v729 = vmax.f32 %v647, 0.0
    %v730 = vmax.f32 %v652, 0.0
    %v731 = vmax.f32 %v657, 0.0
    %v732 = vmax.f32 %v662, 0.0
    %v733 = vmax.f32 %v667, 0.0
    %v734 = vmin.f32 %v670, 6.0
    %v735 = vmin.f32 %v671, 6.0
    %v736 = vmin.f32 %v672, 6.0
    %v737 = vmin.f32 %v673, 6.0
    %v738 = vmin.f32 %v674, 6.0
    %v739 = vmin.f32 %v675, 6.0
    %v740 = vmin.f32 %v676, 6.0
    %v741 = vmin.f32 %v677, 6.0
    %v742 = vmin.f32 %v678, 6.0
    %v743 = vmin.f32 %v679, 6.0
    %v744 = vmin.f32 %v680, 6.0
    %v745 = vmin.f32 %v681, 6.0
    %v746 = vmin.f32 %v682, 6.0
    %v747 = vmin.f32 %v683, 6.0
    %v748 = vmin.f32 %v684, 6.0
    %v749 = vmin.f32 %v685, 6.0
    %v750 = vmin.f32 %v686, 6.0
    %v751 = vmin.f32 %v687, 6.0
    %v752 = vmin.f32 %v688, 6.0
    %v753 = vmin.f32 %v689, 6.0
    %v754 = vmin.f32 %v690, 6.0
    %v755 = vmin.f32 %v691, 6.0
    %v756 = vmin.f32 %v692, 6.0
    %v757 = vmin.f32 %v693, 6.0
    %v758 = vmin.f32 %v694, 6.0
    %v759 = vmin.f32 %v695, 6.0
    %v760 = vmin.f32 %v696, 6.0
    %v761 = vmin.f32 %v697, 6.0
    %v762 = vmin.f32 %v698, 6.0
    %v763 = vmin.f32 %v699, 6.0
    %v764 = vmin.f32 %v700, 6.0
    %v765 = vmin.f32 %v701, 6.0
    %v766 = vmin.f32 %v702, 6.0
    %v767 = vmin.f32 %v703, 6.0
    %v768 = vmin.f32 %v704, 6.0
    %v769 = vmin.f32 %v705, 6.0
    %v770 = vmin.f32 %v706, 6.0
    %v771 = vmin.f32 %v707, 6.0
    %v772 = vmin.f32 %v708, 6.0
    %v773 = vmin.f32 %v709, 6.0
    %v774 = vmin.f32 %v710, 6.0
    %v775 = vmin.f32 %v711, 6.0
    %v776 = vmin.f32 %v712, 6.0
    %v777 = vmin.f32 %v713, 6.0
    %v778 = vmin.f32 %v714, 6.0
    %v779 = vmin.f32 %v715, 6.0
    %v780 = vmin.f32 %v716, 6.0
    %v781 = vmin.f32 %v717, 6.0
    %v782 = vmin.f32 %v718, 6.0
    %v783 = vmin.f32 %v719, 6.0
    %v784 = vmin.f32 %v720, 6.0
    %v785 = vmin.f32 %v721, 6.0
    %v786 = vmin.f32 %v722, 6.0
    %v787 = vmin.f32 %v723, 6.0
    %v788 = vmin.f32 %v724, 6.0
    %v789 = vmin.f32 %v725, 6.0
    %v790 = vmin.f32 %v726, 6.0
    %v791 = vmin.f32 %v727, 6.0
    %v792 = vmin.f32 %v728, 6.0
    %v793 = vmin.f32 %v729, 6.0
    %v794 = vmin.f32 %v730, 6.0
    %v795 = vmin.f32 %v731, 6.0
    %v796 = vmin.f32 %v732, 6.0
    %v797 = vmin.f32 %v733, 6.0
    %v798 = vadd.f32 %v734, %v735
    %v799 = vadd.f32 %v798, %v736
    %v800 = vadd.f32 %v799, %v737
    %v801 = vadd.f32 %v800, %v738
    %v802 = vadd.f32 %v801, %v739
    %v803 = vadd.f32 %v802, %v740
    %v804 = vadd.f32 %v803, %v741
    %v805 = vadd.f32 %v804, %v742
    %v806 = vadd.f32 %v805, %v743
    %v807 = vadd.f32 %v806, %v744
    %v808 = vadd.f32 %v807, %v745
    %v809 = vadd.f32 %v808, %v746
    %v810 = vadd.f32 %v809, %v747
    %v811 = vadd.f32 %v810, %v748
    %v812 = vadd.f32 %v811, %v749
    %v813 = vadd.f32 %v812, %v750
    %v814 = vadd.f32 %v813, %v751
    %v815 = vadd.f32 %v814, %v752
    %v816 = vadd.f32 %v815, %v753
    %v817 = vadd.f32 %v816, %v754
    %v818 = vadd.f32 %v817, %v755
    %v819 = vadd.f32 %v818, %v756
    %v820 = vadd.f32 %v819, %v757
    %v821 = vadd.f32 %v820, %v758
    %v822 = vadd.f32 %v821, %v759
    %v823 = vadd.f32 %v822, %v760
    %v824 = vadd.f32 %v823, %v761
    %v825 = vadd.f32 %v824, %v762
    %v826 = vadd.f32 %v825, %v763
    %v827 = vadd.f32 %v826, %v764
    %v828 = vadd.f32 %v827, %v765
    %v829 = vrot.slane %v828, 4
    %v830 = vadd.f32 %v828, %v829
    %v831 = vrot.slane %v830, 2
    %v832 = vadd.f32 %v830, %v831
    %v833 = vrot.slane %v832, 1
    %v834 = vadd.f32 %v832, %v833
    %v835 = vadd.f32 %v766, %v767
    %v836 = vadd.f32 %v835, %v768
    %v837 = vadd.f32 %v836, %v769
    %v838 = vadd.f32 %v837, %v770
    %v839 = vadd.f32 %v838, %v771
    %v840 = vadd.f32 %v839, %v772
    %v841 = vadd.f32 %v840, %v773
    %v842 = vadd.f32 %v841, %v774
    %v843 = vadd.f32 %v842, %v775
    %v844 = vadd.f32 %v843, %v776
    %v845 = vadd.f32 %v844, %v777
    %v846 = vadd.f32 %v845, %v778
    %v847 = vadd.f32 %v846, %v779
    %v848 = vadd.f32 %v847, %v780
    %v849 = vadd.f32 %v848, %v781
    %v850 = vadd.f32 %v849, %v782
    %v851 = vadd.f32 %v850, %v783
    %v852 = vadd.f32 %v851, %v784
    %v853 = vadd.f32 %v852, %v785
    %v854 = vadd.f32 %v853, %v786
    %v855 = vadd.f32 %v854, %v787
    %v856 = vadd.f32 %v855, %v788
    %v857 = vadd.f32 %v856, %v789
    %v858 = vadd.f32 %v857, %v790
    %v859 = vadd.f32 %v858, %v791
    %v860 = vadd.f32 %v859, %v792
    %v861 = vadd.f32 %v860, %v793
    %v862 = vadd.f32 %v861, %v794
    %v863 = vadd.f32 %v862, %v795
    %v864 = vadd.f32 %v863, %v796
    %v865 = vadd.f32 %v864, %v797
    %v866 = vrot.slane %v865, 4
    %v867 = vadd.f32 %v865, %v866
    %v868 = vrot.slane %v867, 2
    %v869 = vadd.f32 %v867, %v868
    %v870 = vrot.slane %v869, 1
    %v871 = vadd.f32 %v869, %v870
    %v872 = vrcp.pop 256.0
    %v873 = vmul.f32 %v834, %v872
    %v874 = vmul.f32 %v871, %v872
    %v875 = vld [vmem:[%s2] sm:$0xff]
    %v876 = vld [vmem:[%s2 + $0x8] sm:$0xff]
    %v877 = vld [vmem:[%s2 + $0x10] sm:$0xff]
    %v878 = vld [vmem:[%s2 + $0x18] sm:$0xff]
    %v879 = vld [vmem:[%s2 + $0x20] sm:$0xff]
    %v880 = vld [vmem:[%s2 + $0x28] sm:$0xff]
    %v881 = vld [vmem:[%s2 + $0x30] sm:$0xff]
    %v882 = vld [vmem:[%s2 + $0x38] sm:$0xff]
    %v883 = vld [vmem:[%s2 + $0x40] sm:$0xff]
    %v884 = vld [vmem:[%s2 + $0x48] sm:$0xff]
    %v885 = vld [vmem:[%s2 + $0x50] sm:$0xff]
    %v886 = vld [vmem:[%s2 + $0x58] sm:$0xff]
    %v887 = vld [vmem:[%s2 + $0x60] sm:$0xff]
    %v888 = vld [vmem:[%s2 + $0x68] sm:$0xff]
    %v889 = vld [vmem:[%s2 + $0x70] sm:$0xff]
    %v890 = vld [vmem:[%s2 + $0x78] sm:$0xff]
    %v891 = vld [vmem:[%s3 + $0x1] sm:$0x1]
    %v892 = vlaneseq
    %v893 = vshrl.u32 %v892, 7
    %v894 = vsub.s32 0, %v893
    %v895 = vrot.slane %v891, %v894
    %vm898 = vcmask 1041409
    %v899 = vsel %vm898, %v874, %v873
    %901 = vmatprep.subr.mxu0 0.0
    %902 = vmatpush1.msra.mxu0 %v875
    %903 = vmatprep.subr.mxu0 0.0
    %904 = vmatpush1.msra.mxu0 %v876
    %905 = vmatprep.subr.mxu0 0.0
    %906 = vmatpush1.msra.mxu0 %v877
    %907 = vmatprep.subr.mxu0 0.0
    %908 = vmatpush1.msra.mxu0 %v878
    %909 = vmatprep.subr.mxu0 0.0
    %910 = vmatpush1.msra.mxu0 %v879
    %911 = vmatprep.subr.mxu0 0.0
    %912 = vmatpush1.msra.mxu0 %v880
    %913 = vmatprep.subr.mxu0 0.0
    %914 = vmatpush1.msra.mxu0 %v881
    %915 = vmatprep.subr.mxu0 0.0
    %916 = vmatpush1.msra.mxu0 %v882
    %917 = vmatprep.subr.mxu0 0.0
    %918 = vmatpush1.msra.mxu0 %v883
    %919 = vmatprep.subr.mxu0 0.0
    %920 = vmatpush1.msra.mxu0 %v884
    %921 = vmatprep.subr.mxu0 0.0
    %922 = vmatpush1.msra.mxu0 %v885
    %923 = vmatprep.subr.mxu0 0.0
    %924 = vmatpush1.msra.mxu0 %v886
    %925 = vmatprep.subr.mxu0 0.0
    %926 = vmatpush1.msra.mxu0 %v887
    %927 = vmatprep.subr.mxu0 0.0
    %928 = vmatpush1.msra.mxu0 %v888
    %929 = vmatprep.subr.mxu0 0.0
    %930 = vmatpush1.msra.mxu0 %v889
    %931 = vmatprep.subr.mxu0 0.0
    %932 = vmatpush1.msra.mxu0 %v890
    %933 = vmatprep.subr.mxu0 0.0
    %934 = vmatpush1.msra.mxu0 0.0
    %935 = vmatprep.subr.mxu0 0.0
    %936 = vmatpush1.msra.mxu0 0.0
    %937 = vmatprep.subr.mxu0 0.0
    %938 = vmatpush1.msra.mxu0 0.0
    %939 = vmatprep.subr.mxu0 0.0
    %940 = vmatpush1.msra.mxu0 0.0
    %941 = vmatprep.subr.mxu0 0.0
    %942 = vmatpush1.msra.mxu0 0.0
    %943 = vmatprep.subr.mxu0 0.0
    %944 = vmatpush1.msra.mxu0 0.0
    %945 = vmatprep.subr.mxu0 0.0
    %946 = vmatpush1.msra.mxu0 0.0
    %947 = vmatprep.subr.mxu0 0.0
    %948 = vmatpush1.msra.mxu0 0.0
    %949 = vmatprep.subr.mxu0 0.0
    %950 = vmatpush1.msra.mxu0 0.0
    %951 = vmatprep.subr.mxu0 0.0
    %952 = vmatpush1.msra.mxu0 0.0
    %953 = vmatprep.subr.mxu0 0.0
    %954 = vmatpush1.msra.mxu0 0.0
    %955 = vmatprep.subr.mxu0 0.0
    %956 = vmatpush1.msra.mxu0 0.0
    %957 = vmatprep.subr.mxu0 0.0
    %958 = vmatpush1.msra.mxu0 0.0
    %959 = vmatprep.subr.mxu0 0.0
    %960 = vmatpush1.msra.mxu0 0.0
    %961 = vmatprep.subr.mxu0 0.0
    %962 = vmatpush1.msra.mxu0 0.0
    %963 = vmatprep.subr.mxu0 0.0
    %964 = vmatpush1.msra.mxu0 0.0
    %965 = vmatprep.mubr.f32.mxu0 0.0
    %966 = vmatmul.mubr.f32.gmra.mrb[0].mxu0 %v899
    %v967 = vpop.f32.mrb[0].mxu0
    %v968 = vadd.f32 %v895, %v967
    %v969 = vpop.f32.mrb[0].mxu0
    %970 = vdwg.mxu0
    %v971 = vmax.f32 %v968, 0.0
    %s972 = scalar_lea.vmem %s2, 128
    %v973 = vld [vmem:[%s972] sm:$0xff]
    %v974 = vld [vmem:[%s972 + $0x8] sm:$0xff]
    %v975 = vld [vmem:[%s972 + $0x10] sm:$0xff]
    %v976 = vld [vmem:[%s972 + $0x18] sm:$0xff]
    %v977 = vld [vmem:[%s972 + $0x20] sm:$0xff]
    %v978 = vld [vmem:[%s972 + $0x28] sm:$0xff]
    %v979 = vld [vmem:[%s972 + $0x30] sm:$0xff]
    %v980 = vld [vmem:[%s972 + $0x38] sm:$0xff]
    %v981 = vld [vmem:[%s972 + $0x40] sm:$0xff]
    %v982 = vld [vmem:[%s972 + $0x48] sm:$0xff]
    %v983 = vld [vmem:[%s972 + $0x50] sm:$0xff]
    %v984 = vld [vmem:[%s972 + $0x58] sm:$0xff]
    %v985 = vld [vmem:[%s972 + $0x60] sm:$0xff]
    %v986 = vld [vmem:[%s972 + $0x68] sm:$0xff]
    %v987 = vld [vmem:[%s972 + $0x70] sm:$0xff]
    %v988 = vld [vmem:[%s972 + $0x78] sm:$0xff]
    %v989 = vld [vmem:[%s3 + $0x2] sm:$0x1]
    %v990 = vlaneseq
    %v991 = vshrl.u32 %v990, 7
    %v992 = vsub.s32 0, %v991
    %v993 = vrot.slane %v989, %v992
    %994 = vmatprep.subr.mxu0 0.0
    %995 = vmatpush1.msra.mxu0 %v973
    %996 = vmatprep.subr.mxu0 0.0
    %997 = vmatpush1.msra.mxu0 %v974
    %998 = vmatprep.subr.mxu0 0.0
    %999 = vmatpush1.msra.mxu0 %v975
    %1000 = vmatprep.subr.mxu0 0.0
    %1001 = vmatpush1.msra.mxu0 %v976
    %1002 = vmatprep.subr.mxu0 0.0
    %1003 = vmatpush1.msra.mxu0 %v977
    %1004 = vmatprep.subr.mxu0 0.0
    %1005 = vmatpush1.msra.mxu0 %v978
    %1006 = vmatprep.subr.mxu0 0.0
    %1007 = vmatpush1.msra.mxu0 %v979
    %1008 = vmatprep.subr.mxu0 0.0
    %1009 = vmatpush1.msra.mxu0 %v980
    %1010 = vmatprep.subr.mxu0 0.0
    %1011 = vmatpush1.msra.mxu0 %v981
    %1012 = vmatprep.subr.mxu0 0.0
    %1013 = vmatpush1.msra.mxu0 %v982
    %1014 = vmatprep.subr.mxu0 0.0
    %1015 = vmatpush1.msra.mxu0 %v983
    %1016 = vmatprep.subr.mxu0 0.0
    %1017 = vmatpush1.msra.mxu0 %v984
    %1018 = vmatprep.subr.mxu0 0.0
    %1019 = vmatpush1.msra.mxu0 %v985
    %1020 = vmatprep.subr.mxu0 0.0
    %1021 = vmatpush1.msra.mxu0 %v986
    %1022 = vmatprep.subr.mxu0 0.0
    %1023 = vmatpush1.msra.mxu0 %v987
    %1024 = vmatprep.subr.mxu0 0.0
    %1025 = vmatpush1.msra.mxu0 %v988
    %1026 = vmatprep.subr.mxu0 0.0
    %1027 = vmatpush1.msra.mxu0 0.0
    %1028 = vmatprep.subr.mxu0 0.0
    %1029 = vmatpush1.msra.mxu0 0.0
    %1030 = vmatprep.subr.mxu0 0.0
    %1031 = vmatpush1.msra.mxu0 0.0
    %1032 = vmatprep.subr.mxu0 0.0
    %1033 = vmatpush1.msra.mxu0 0.0
    %1034 = vmatprep.subr.mxu0 0.0
    %1035 = vmatpush1.msra.mxu0 0.0
    %1036 = vmatprep.subr.mxu0 0.0
    %1037 = vmatpush1.msra.mxu0 0.0
    %1038 = vmatprep.subr.mxu0 0.0
    %1039 = vmatpush1.msra.mxu0 0.0
    %1040 = vmatprep.subr.mxu0 0.0
    %1041 = vmatpush1.msra.mxu0 0.0
    %1042 = vmatprep.subr.mxu0 0.0
    %1043 = vmatpush1.msra.mxu0 0.0
    %1044 = vmatprep.subr.mxu0 0.0
    %1045 = vmatpush1.msra.mxu0 0.0
    %1046 = vmatprep.subr.mxu0 0.0
    %1047 = vmatpush1.msra.mxu0 0.0
    %1048 = vmatprep.subr.mxu0 0.0
    %1049 = vmatpush1.msra.mxu0 0.0
    %1050 = vmatprep.subr.mxu0 0.0
    %1051 = vmatpush1.msra.mxu0 0.0
    %1052 = vmatprep.subr.mxu0 0.0
    %1053 = vmatpush1.msra.mxu0 0.0
    %1054 = vmatprep.subr.mxu0 0.0
    %1055 = vmatpush1.msra.mxu0 0.0
    %1056 = vmatprep.subr.mxu0 0.0
    %1057 = vmatpush1.msra.mxu0 0.0
    %1058 = vmatprep.mubr.f32.mxu0 0.0
    %1059 = vmatmul.mubr.f32.gmra.mrb[0].mxu0 %v971
    %v1060 = vpop.f32.mrb[0].mxu0
    %v1061 = vadd.f32 %v993, %v1060
    %v1062 = vpop.f32.mrb[0].mxu0
    %1063 = vdwg.mxu0
    %v1064 = vmax.f32 %v1061, 0.0
    %s1065 = scalar_lea.vmem %s2, 256
    %v1066 = vld [vmem:[%s1065] sm:$0xff]
    %v1067 = vld [vmem:[%s1065 + $0x8] sm:$0xff]
    %v1068 = vld [vmem:[%s1065 + $0x10] sm:$0xff]
    %v1069 = vld [vmem:[%s1065 + $0x18] sm:$0xff]
    %v1070 = vld [vmem:[%s1065 + $0x20] sm:$0xff]
    %v1071 = vld [vmem:[%s1065 + $0x28] sm:$0xff]
    %v1072 = vld [vmem:[%s1065 + $0x30] sm:$0xff]
    %v1073 = vld [vmem:[%s1065 + $0x38] sm:$0xff]
    %v1074 = vld [vmem:[%s1065 + $0x40] sm:$0xff]
    %v1075 = vld [vmem:[%s1065 + $0x48] sm:$0xff]
    %v1076 = vld [vmem:[%s1065 + $0x50] sm:$0xff]
    %v1077 = vld [vmem:[%s1065 + $0x58] sm:$0xff]
    %v1078 = vld [vmem:[%s1065 + $0x60] sm:$0xff]
    %v1079 = vld [vmem:[%s1065 + $0x68] sm:$0xff]
    %v1080 = vld [vmem:[%s1065 + $0x70] sm:$0xff]
    %v1081 = vld [vmem:[%s1065 + $0x78] sm:$0xff]
    %v1082 = vld [vmem:[%s3 + $0x3] sm:$0x1]
    %v1083 = vlaneseq
    %v1084 = vshrl.u32 %v1083, 7
    %v1085 = vsub.s32 0, %v1084
    %v1086 = vrot.slane %v1082, %v1085
    %1087 = vmatprep.subr.mxu0 0.0
    %1088 = vmatpush1.msra.mxu0 %v1066
    %1089 = vmatprep.subr.mxu0 0.0
    %1090 = vmatpush1.msra.mxu0 %v1067
    %1091 = vmatprep.subr.mxu0 0.0
    %1092 = vmatpush1.msra.mxu0 %v1068
    %1093 = vmatprep.subr.mxu0 0.0
    %1094 = vmatpush1.msra.mxu0 %v1069
    %1095 = vmatprep.subr.mxu0 0.0
    %1096 = vmatpush1.msra.mxu0 %v1070
    %1097 = vmatprep.subr.mxu0 0.0
    %1098 = vmatpush1.msra.mxu0 %v1071
    %1099 = vmatprep.subr.mxu0 0.0
    %1100 = vmatpush1.msra.mxu0 %v1072
    %1101 = vmatprep.subr.mxu0 0.0
    %1102 = vmatpush1.msra.mxu0 %v1073
    %1103 = vmatprep.subr.mxu0 0.0
    %1104 = vmatpush1.msra.mxu0 %v1074
    %1105 = vmatprep.subr.mxu0 0.0
    %1106 = vmatpush1.msra.mxu0 %v1075
    %1107 = vmatprep.subr.mxu0 0.0
    %1108 = vmatpush1.msra.mxu0 %v1076
    %1109 = vmatprep.subr.mxu0 0.0
    %1110 = vmatpush1.msra.mxu0 %v1077
    %1111 = vmatprep.subr.mxu0 0.0
    %1112 = vmatpush1.msra.mxu0 %v1078
    %1113 = vmatprep.subr.mxu0 0.0
    %1114 = vmatpush1.msra.mxu0 %v1079
    %1115 = vmatprep.subr.mxu0 0.0
    %1116 = vmatpush1.msra.mxu0 %v1080
    %1117 = vmatprep.subr.mxu0 0.0
    %1118 = vmatpush1.msra.mxu0 %v1081
    %1119 = vmatprep.subr.mxu0 0.0
    %1120 = vmatpush1.msra.mxu0 0.0
    %1121 = vmatprep.subr.mxu0 0.0
    %1122 = vmatpush1.msra.mxu0 0.0
    %1123 = vmatprep.subr.mxu0 0.0
    %1124 = vmatpush1.msra.mxu0 0.0
    %1125 = vmatprep.subr.mxu0 0.0
    %1126 = vmatpush1.msra.mxu0 0.0
    %1127 = vmatprep.subr.mxu0 0.0
    %1128 = vmatpush1.msra.mxu0 0.0
    %1129 = vmatprep.subr.mxu0 0.0
    %1130 = vmatpush1.msra.mxu0 0.0
    %1131 = vmatprep.subr.mxu0 0.0
    %1132 = vmatpush1.msra.mxu0 0.0
    %1133 = vmatprep.subr.mxu0 0.0
    %1134 = vmatpush1.msra.mxu0 0.0
    %1135 = vmatprep.subr.mxu0 0.0
    %1136 = vmatpush1.msra.mxu0 0.0
    %1137 = vmatprep.subr.mxu0 0.0
    %1138 = vmatpush1.msra.mxu0 0.0
    %1139 = vmatprep.subr.mxu0 0.0
    %1140 = vmatpush1.msra.mxu0 0.0
    %1141 = vmatprep.subr.mxu0 0.0
    %1142 = vmatpush1.msra.mxu0 0.0
    %1143 = vmatprep.subr.mxu0 0.0
    %1144 = vmatpush1.msra.mxu0 0.0
    %1145 = vmatprep.subr.mxu0 0.0
    %1146 = vmatpush1.msra.mxu0 0.0
    %1147 = vmatprep.subr.mxu0 0.0
    %1148 = vmatpush1.msra.mxu0 0.0
    %1149 = vmatprep.subr.mxu0 0.0
    %1150 = vmatpush1.msra.mxu0 0.0
    %1151 = vmatprep.mubr.f32.mxu0 0.0
    %1152 = vmatmul.mubr.f32.gmra.mrb[0].mxu0 %v1064
    %v1153 = vpop.f32.mrb[0].mxu0
    %v1154 = vadd.f32 %v1086, %v1153
    %v1155 = vpop.f32.mrb[0].mxu0
    %1156 = vdwg.mxu0
    %vm1157 = vcmask 1041408
    %v1158 = vsel %vm1157, %v1154, -inf
    %1159 = vmax.xlane.f32.xlu0 %v1158
    %v1160 = vpop.xlane.xlu0 %1159
    %v1161 = vsub.f32 %v1154, %v1160
    %v1162 = vmul.f32 %v1161, 1.442695
    %v1163 = vpow.pop %v1162
    %v1164 = vsel %vm1157, %v1163, 0.0
    %1165 = vadd.xlane.f32.xlu0 %v1164
    %v1166 = vpop.xlane.xlu0 %1165
    %v1167 = vrcp.pop %v1166
    %v1168 = vmul.f32 %v1163, %v1167
    %1169 = vst [vmem:[#allocation2] sm:$0x3] %v1168
    // Predicated region
    $region18: #{simple_cnn_forward.1} parent=1 // pred_check
      _
    $region19: #{simple_cnn_forward.1} parent=1 // pred_check_branch
      %1171 = sbr.rel (0) target = $region21
    $region20: #{simple_cnn_forward.1} parent=1 // pred_region
      %s1173 = ssub.s32 32, 32
      %1174 = vsyncadd [#allocation3], %s1173
      %s1176 = sshll.u32 [#allocation2], 4
      %s1177 = int_to_ptr.vmem [resolvable:$true] %s1176
      %1179 = dma.vmem_to_hbm [thread:$0]  %s1177, 32, %s4, [#allocation3]
    $region21: #{simple_cnn_forward.1} parent=1 // pred_fallthru
      _
    // Predicated region
    $region22: #{simple_cnn_forward.1} parent=1 // pred_check
      _
    $region23: #{simple_cnn_forward.1} parent=1 // pred_check_branch
      %1181 = sbr.rel (0) target = $region25
    $region24: #{simple_cnn_forward.1} parent=1 // pred_region
      %1182 = dma.done [#allocation3], 32
    $region25: #{simple_cnn_forward.1} parent=1 // pred_fallthru
      _
    %1183 = vsyncpa [#allocation3], 1

</llo_original>
